<compile_context>
chip_gen: v7x
topology: tpu7x:2x2x1
jax: 0.10.0
libtpu: 0.0.40
codegen_flags: <defaults>
</compile_context>

<pallas_src>
import functools

import jax
import jax.numpy as jnp
from jax import lax
from jax.experimental import pallas as pl
from jax.experimental.pallas import tpu as pltpu


def _pooling_kernel(x_ref, aux_ref, o_ref, *, w):
    """x_ref  : (rt, HW)  input block, one flattened HxW image per row (native dtype)
       aux_ref: (3,  HW)  rows = [1/valid_count, mask(w>0), mask(w<W-1)] (f32)
       o_ref  : (rt, HW)  output block = avgpool3x3(x) - x
       w      : static image width (shift amount for the H-direction pass)."""
    xf = x_ref[...].astype(jnp.float32)                     # (rt, HW)
    rt, hw = xf.shape

    inv = aux_ref[0:1, :]                                   # (1, HW) broadcasts over rt
    ml = aux_ref[1:2, :]                                    # zero where w == 0
    mr = aux_ref[2:3, :]                                    # zero where w == W-1

    z1 = jnp.zeros((rt, 1), jnp.float32)
    zw = jnp.zeros((rt, w), jnp.float32)

    # --- W-direction (lane) 3-tap sum with zero boundaries ------------------
    left = jnp.concatenate([z1, xf[:, :hw - 1]], axis=1)    # x[i-1] at i
    right = jnp.concatenate([xf[:, 1:], z1], axis=1)        # x[i+1] at i
    rs = xf + ml * left + mr * right                        # row sums

    # --- H-direction: shift by a whole image row (W lanes) ------------------
    up = jnp.concatenate([zw, rs[:, :hw - w]], axis=1)      # rs[i-W] at i (zeros at h==0)
    down = jnp.concatenate([rs[:, w:], zw], axis=1)         # rs[i+W] at i (zeros at h==H-1)
    s = rs + up + down                                      # full 3x3 valid sum

    # avgpool(count_include_pad=False) - x
    o_ref[...] = (s * inv - xf).astype(o_ref.dtype)


def _pick_row_tile(n_rows, hw, itemsize, budget_bytes=4 * 1024 * 1024):
    """Largest divisor of n_rows whose per-step working set fits a small VMEM budget.
    Prefers multiples of 8 (clean sublane tiling) unless n_rows itself fits."""
    per_row = hw * (4 * itemsize + 8 * 4)   # double-buffered in+out + f32 temporaries
    cap = max(1, budget_bytes // max(per_row, 1))
    if n_rows <= cap:
        return n_rows
    for rt in range(min(n_rows, cap), 0, -1):
        if n_rows % rt == 0 and rt % 8 == 0:
            return rt
    for rt in range(min(n_rows, cap), 0, -1):
        if n_rows % rt == 0:
            return rt
    return 1


def pooling_forward(x_nchw):
    """x_nchw: (B, C, H, W) -> (B, C, H, W), matching Pooling.forward (no norm)."""
    B, C, H, W = x_nchw.shape
    HW = H * W
    BC = B * C

    # Free reshape (contiguous collapse of the last two dims).
    x2 = x_nchw.reshape(BC, HW)

    # Grid-invariant aux maps (built once, reused for every grid step).
    hi = jnp.arange(H, dtype=jnp.int32)
    wi = jnp.arange(W, dtype=jnp.int32)
    rc = jnp.minimum(hi + 2, H) - jnp.maximum(hi - 1, 0)     # valid rows per window
    wc = jnp.minimum(wi + 2, W) - jnp.maximum(wi - 1, 0)     # valid cols per window
    inv = (1.0 / (rc[:, None] * wc[None, :]).astype(jnp.float32)).reshape(HW)
    ml = jnp.broadcast_to((wi > 0).astype(jnp.float32)[None, :], (H, W)).reshape(HW)
    mr = jnp.broadcast_to((wi < W - 1).astype(jnp.float32)[None, :], (H, W)).reshape(HW)
    aux = jnp.stack([inv, ml, mr], axis=0)                   # (3, HW) f32

    rt = _pick_row_tile(BC, HW, jnp.dtype(x_nchw.dtype).itemsize)

    out2 = pl.pallas_call(
        functools.partial(_pooling_kernel, w=W),
        out_shape=jax.ShapeDtypeStruct((BC, HW), x_nchw.dtype),
        grid_spec=pltpu.PrefetchScalarGridSpec(
            num_scalar_prefetch=0,
            grid=(BC // rt,),
            in_specs=[
                pl.BlockSpec((rt, HW), lambda i: (i, 0)),
                pl.BlockSpec((3, HW), lambda i: (0, 0)),     # resident constant
            ],
            out_specs=pl.BlockSpec((rt, HW), lambda i: (i, 0)),
        ),
        compiler_params=pltpu.CompilerParams(
            dimension_semantics=("parallel",)),
    )(x2, aux)

    return out2.reshape(B, C, H, W)


def _reference(x_nchw):
    """Pure-JAX reference: AvgPool2d(3, stride=1, pad=1, count_include_pad=False)(x) - x."""
    pads = [(0, 0), (0, 0), (1, 1), (1, 1)]
    s = lax.reduce_window(x_nchw.astype(jnp.float32), 0.0, lax.add,
                          (1, 1, 3, 3), (1, 1, 1, 1), pads)
    c = lax.reduce_window(jnp.ones_like(x_nchw, dtype=jnp.float32), 0.0, lax.add,
                          (1, 1, 3, 3), (1, 1, 1, 1), pads)
    return (s / c - x_nchw.astype(jnp.float32)).astype(x_nchw.dtype)


# TODO(synk): the optional normalize_input=True branch (GroupNorm/LayerNorm before the
# pool) is not instantiated in the default module config and is not implemented here.

if __name__ == "__main__":
    key = jax.random.PRNGKey(0)
    B, C, H, W = 2, 4, 16, 16
    x = jax.random.normal(key, (B, C, H, W), dtype=jnp.float32)

    out = pooling_forward(x)
    jax.block_until_ready(out)

    ref = _reference(x)
    assert out.shape == (B, C, H, W)
    assert jnp.allclose(out, ref, atol=1e-5, rtol=1e-5), "mismatch vs reference"

    print("KERNEL_OK")
</pallas_src>

<mosaic_0001>
module attributes {stable_mosaic.version = 11 : i64} {
  func.func @_pooling_kernel(%arg0: i32, %arg1: memref<8x256xf32, #tpu.memory_space<vmem>>, %arg2: memref<3x256xf32, #tpu.memory_space<vmem>>, %arg3: memref<8x256xf32, #tpu.memory_space<vmem>>) attributes {dimension_semantics = [#tpu.dimension_semantics<parallel>], iteration_bounds = array<i64: 1>, scalar_prefetch = 0 : i64, scratch_operands = 0 : i64, tpu.core_type = #tpu.core_type<tc>, window_params = [{transform_indices = @transform_0, window_bounds = array<i64: 8, 256>}, {pipeline_mode = #tpu.pipeline_mode<synchronous>, transform_indices = @transform_1, window_bounds = array<i64: 3, 256>}, {transform_indices = @transform_2, window_bounds = array<i64: 8, 256>}]} {
    %c0 = arith.constant 0 : index
    %c0_0 = arith.constant 0 : index
    %0 = vector.load %arg1[%c0, %c0_0] : memref<8x256xf32, #tpu.memory_space<vmem>>, vector<8x256xf32>
    %c0_1 = arith.constant 0 : index
    %c0_2 = arith.constant 0 : index
    %1 = vector.load %arg2[%c0_1, %c0_2] : memref<3x256xf32, #tpu.memory_space<vmem>>, vector<1x256xf32>
    %c1 = arith.constant 1 : index
    %c0_3 = arith.constant 0 : index
    %2 = vector.load %arg2[%c1, %c0_3] : memref<3x256xf32, #tpu.memory_space<vmem>>, vector<1x256xf32>
    %c2 = arith.constant 2 : index
    %c0_4 = arith.constant 0 : index
    %3 = vector.load %arg2[%c2, %c0_4] : memref<3x256xf32, #tpu.memory_space<vmem>>, vector<1x256xf32>
    %cst = arith.constant 0.000000e+00 : f32
    %4 = vector.broadcast %cst : f32 to vector<8x1xf32>
    %cst_5 = arith.constant 0.000000e+00 : f32
    %5 = vector.broadcast %cst_5 : f32 to vector<8x16xf32>
    %6 = vector.extract_strided_slice %0 {offsets = [0, 0], sizes = [8, 255], strides = [1, 1]} : vector<8x256xf32> to vector<8x255xf32>
    %7 = tpu.concatenate %4, %6 in 1 : vector<8x1xf32>, vector<8x255xf32> -> vector<8x256xf32>
    %8 = vector.extract_strided_slice %0 {offsets = [0, 1], sizes = [8, 255], strides = [1, 1]} : vector<8x256xf32> to vector<8x255xf32>
    %9 = tpu.concatenate %8, %4 in 1 : vector<8x255xf32>, vector<8x1xf32> -> vector<8x256xf32>
    %10 = vector.broadcast %2 : vector<1x256xf32> to vector<8x256xf32>
    %11 = arith.mulf %10, %7 : vector<8x256xf32>
    %12 = arith.addf %0, %11 : vector<8x256xf32>
    %13 = vector.broadcast %3 : vector<1x256xf32> to vector<8x256xf32>
    %14 = arith.mulf %13, %9 : vector<8x256xf32>
    %15 = arith.addf %12, %14 : vector<8x256xf32>
    %16 = vector.extract_strided_slice %15 {offsets = [0, 0], sizes = [8, 240], strides = [1, 1]} : vector<8x256xf32> to vector<8x240xf32>
    %17 = tpu.concatenate %5, %16 in 1 : vector<8x16xf32>, vector<8x240xf32> -> vector<8x256xf32>
    %18 = vector.extract_strided_slice %15 {offsets = [0, 16], sizes = [8, 240], strides = [1, 1]} : vector<8x256xf32> to vector<8x240xf32>
    %19 = tpu.concatenate %18, %5 in 1 : vector<8x240xf32>, vector<8x16xf32> -> vector<8x256xf32>
    %20 = arith.addf %15, %17 : vector<8x256xf32>
    %21 = arith.addf %20, %19 : vector<8x256xf32>
    %22 = vector.broadcast %1 : vector<1x256xf32> to vector<8x256xf32>
    %23 = arith.mulf %21, %22 : vector<8x256xf32>
    %24 = arith.subf %23, %0 : vector<8x256xf32>
    %c0_6 = arith.constant 0 : index
    %c0_7 = arith.constant 0 : index
    %25 = vector.load %arg3[%c0_6, %c0_7] : memref<8x256xf32, #tpu.memory_space<vmem>>, vector<8x256xf32>
    tpu.vector_store %arg3[%c0_6, %c0_7], %24 {strides = array<i32>} : memref<8x256xf32, #tpu.memory_space<vmem>>, vector<8x256xf32>,
    return
  }
  func.func @transform_0(%arg0: i32) -> (i32, i32) {
    %c0_i32 = arith.constant 0 : i32
    %c0_i32_0 = arith.constant 0 : i32
    return %arg0, %c0_i32 : i32, i32
  }
  func.func @transform_1(%arg0: i32) -> (i32, i32) {
    %c0_i32 = arith.constant 0 : i32
    %c0_i32_0 = arith.constant 0 : i32
    %c0_i32_1 = arith.constant 0 : i32
    return %c0_i32, %c0_i32_0 : i32, i32
  }
  func.func @transform_2(%arg0: i32) -> (i32, i32) {
    %c0_i32 = arith.constant 0 : i32
    %c0_i32_0 = arith.constant 0 : i32
    return %arg0, %c0_i32 : i32, i32
  }
}

</mosaic_0001>

<llo_original>
// kernel: tpu_custom_call.1
$region0: #{tpu_custom_call.1}
  #allocation0 [shape = 'u32[]', space=smem, size = 0x4, offset = 0x4, fixed_abs, tag = 'smem constant byte address 0x4 - core index']
  #allocation1 [shape = 'u32[144,128]{1,0:T(1,128)}', space=vmem, size = 0x12000, scoped, tag = 'internal scratch']
  %s0 = inlined_call_operand.hbm [shape: f32[8,256], index: 0, kind: input, shape index: {}]
  %s1 = inlined_call_operand.hbm [shape: f32[3,256], index: 1, kind: input, shape index: {}]
  %s2 = inlined_call_operand.hbm [shape: f32[8,256], index: 2, kind: output, shape index: {}]
  %s3 = sld [smem:[#allocation0]]
  $region26: #{tpu_custom_call.1} parent=0
    _
  %s5 = ssub.s32 1, %s3
  %s6 = scalar_select 0, %s5, %s3
  $region1: #{tpu_custom_call.1} parent=0
    #allocation2 [shape = 'u8[8192]{0}', space=vmem, size = 0x2000, scoped, tag = 'input window, operand 0, single buffered']
    #allocation3 [shape = 's32[1]{0}', space=sflag, size = 0x4, scoped, tag = 'scoped memory for tpu_custom_call.1']
    #allocation4 [shape = 's32[1]{0}', space=sflag, size = 0x4, scoped, tag = 'scoped memory for tpu_custom_call.1']
    #allocation5 [shape = 'u8[4096]{0}', space=vmem, size = 0x1000, scoped, tag = 'input window, operand 1, single buffered']
    #allocation6 [shape = 's32[1]{0}', space=sflag, size = 0x4, scoped, tag = 'scoped memory for tpu_custom_call.1']
    #allocation7 [shape = 'u8[8192]{0}', space=vmem, size = 0x2000, scoped, tag = 'output window, operand 0, single buffered']
    %7 = vsyncpa [#allocation3], 0
    %8 = vsyncpa [#allocation6], 0
    %9 = vsyncpa [#allocation4], 0
    // Predicated region
    $region2: #{tpu_custom_call.1} parent=1 // pred_check
      _
    $region3: #{tpu_custom_call.1} parent=1 // pred_check_branch
      %11 = sbr.rel (0) target = $region5
    $region4: #{tpu_custom_call.1} parent=1 // pred_region
      %s13 = ssub.s32 256, 256
      %14 = vsyncadd [#allocation3], %s13
      %s16 = sshll.u32 [#allocation2], 4
      %s17 = int_to_ptr.vmem [resolvable:$true] %s16
      %19 = dma.hbm_to_vmem [thread:$0]  %s0, 256, %s17, [#allocation3]
    $region5: #{tpu_custom_call.1} parent=1 // pred_fallthru
      _
    // Predicated region
    $region6: #{tpu_custom_call.1} parent=1 // pred_check
      _
    $region7: #{tpu_custom_call.1} parent=1 // pred_check_branch
      %21 = sbr.rel (0) target = $region9
    $region8: #{tpu_custom_call.1} parent=1 // pred_region
      %s23 = ssub.s32 128, 128
      %24 = vsyncadd [#allocation6], %s23
      %s26 = sshll.u32 [#allocation5], 4
      %s27 = int_to_ptr.vmem [resolvable:$true] %s26
      %29 = dma.hbm_to_vmem [thread:$0]  %s1, 128, %s27, [#allocation6]
    $region9: #{tpu_custom_call.1} parent=1 // pred_fallthru
      _
    // Predicated region
    $region10: #{tpu_custom_call.1} parent=1 // pred_check
      _
    $region11: #{tpu_custom_call.1} parent=1 // pred_check_branch
      %31 = sbr.rel (0) target = $region13
    $region12: #{tpu_custom_call.1} parent=1 // pred_region
      %32 = dma.done [#allocation3], 256
    $region13: #{tpu_custom_call.1} parent=1 // pred_fallthru
      _
    // Predicated region
    $region14: #{tpu_custom_call.1} parent=1 // pred_check
      _
    $region15: #{tpu_custom_call.1} parent=1 // pred_check_branch
      %34 = sbr.rel (0) target = $region17
    $region16: #{tpu_custom_call.1} parent=1 // pred_region
      %35 = dma.done [#allocation6], 128
    $region17: #{tpu_custom_call.1} parent=1 // pred_fallthru
      _
    %v36 = vld [vmem:[#allocation2] sm:$0xff]
    %v37 = vld [vmem:[#allocation2 + $0x8] sm:$0xff]
    %v38 = vld [vmem:[#allocation5] ss:$4 sm:$0x3]
    %s39 = scalar_lea.vmem [#allocation5], 1
    %v40 = vld [vmem:[%s39] ss:$4 sm:$0x3]
    %s41 = scalar_lea.vmem [#allocation5], 2
    %v42 = vld [vmem:[%s41] ss:$4 sm:$0x3]
    %45 = vrot.lane.b32.xlu0 %v36, 1
    %v46 = vpop.permute.xlu0 %45
    %47 = vrot.lane.b32.xlu0 %v37, 1
    %v48 = vpop.permute.xlu0 %47
    %vm49 = vcmask 7168
    %v50 = vsel %vm49, %v46, %v48
    %v53 = vsel %vm49, 0.0, %v46
    %54 = vrot.lane.b32.xlu0 %v36, 127
    %v55 = vpop.permute.xlu0 %54
    %56 = vrot.lane.b32.xlu0 %v37, 127
    %v57 = vpop.permute.xlu0 %56
    %vm58 = vcmask 1039360
    %v59 = vsel %vm58, %v55, %v57
    %v62 = vsel %vm58, %v57, 0.0
    %v64 = vlaneseq
    %v65 = vshrl.u32 %v64, 7
    %v66 = vsub.s32 0, %v65
    %v67 = vrot.slane %v40, %v66
    %v68 = vlaneseq
    %v69 = vshrl.u32 %v68, 7
    %v70 = vsub.s32 1, %v69
    %v71 = vrot.slane %v40, %v70
    %v74 = vmul.f32 %v67, %v53
    %v75 = vmul.f32 %v71, %v50
    %v76 = vadd.f32 %v36, %v74
    %v77 = vadd.f32 %v37, %v75
    %v79 = vlaneseq
    %v80 = vshrl.u32 %v79, 7
    %v81 = vsub.s32 0, %v80
    %v82 = vrot.slane %v42, %v81
    %v83 = vlaneseq
    %v84 = vshrl.u32 %v83, 7
    %v85 = vsub.s32 1, %v84
    %v86 = vrot.slane %v42, %v85
    %v89 = vmul.f32 %v82, %v59
    %v90 = vmul.f32 %v86, %v62
    %v91 = vadd.f32 %v76, %v89
    %v92 = vadd.f32 %v77, %v90
    %95 = vrot.lane.b32.xlu0 %v91, 16
    %v96 = vpop.permute.xlu0 %95
    %97 = vrot.lane.b32.xlu0 %v92, 16
    %v98 = vpop.permute.xlu0 %97
    %vm99 = vcmask 130048
    %v100 = vsel %vm99, %v96, %v98
    %v103 = vsel %vm99, 0.0, %v96
    %104 = vrot.lane.b32.xlu0 %v91, 112
    %v105 = vpop.permute.xlu0 %104
    %106 = vrot.lane.b32.xlu0 %v92, 112
    %v107 = vpop.permute.xlu0 %106
    %vm108 = vcmask 916480
    %v109 = vsel %vm108, %v105, %v107
    %v112 = vsel %vm108, %v107, 0.0
    %v113 = vadd.f32 %v91, %v103
    %v114 = vadd.f32 %v92, %v100
    %v115 = vadd.f32 %v113, %v109
    %v116 = vadd.f32 %v114, %v112
    %v118 = vlaneseq
    %v119 = vshrl.u32 %v118, 7
    %v120 = vsub.s32 0, %v119
    %v121 = vrot.slane %v38, %v120
    %v122 = vlaneseq
    %v123 = vshrl.u32 %v122, 7
    %v124 = vsub.s32 1, %v123
    %v125 = vrot.slane %v38, %v124
    %v128 = vmul.f32 %v115, %v121
    %v129 = vmul.f32 %v116, %v125
    %v130 = vsub.f32 %v128, %v36
    %v131 = vsub.f32 %v129, %v37
    %132 = vst [vmem:[#allocation7] sm:$0xff] %v130
    %133 = vst [vmem:[#allocation7 + $0x8] sm:$0xff] %v131
    // Predicated region
    $region18: #{tpu_custom_call.1} parent=1 // pred_check
      _
    $region19: #{tpu_custom_call.1} parent=1 // pred_check_branch
      %135 = sbr.rel (0) target = $region21
    $region20: #{tpu_custom_call.1} parent=1 // pred_region
      %s137 = ssub.s32 256, 256
      %138 = vsyncadd [#allocation4], %s137
      %s140 = sshll.u32 [#allocation7], 4
      %s141 = int_to_ptr.vmem [resolvable:$true] %s140
      %143 = dma.vmem_to_hbm [thread:$0]  %s141, 256, %s2, [#allocation4]
    $region21: #{tpu_custom_call.1} parent=1 // pred_fallthru
      _
    // Predicated region
    $region22: #{tpu_custom_call.1} parent=1 // pred_check
      _
    $region23: #{tpu_custom_call.1} parent=1 // pred_check_branch
      %145 = sbr.rel (0) target = $region25
    $region24: #{tpu_custom_call.1} parent=1 // pred_region
      %146 = dma.done [#allocation4], 256
    $region25: #{tpu_custom_call.1} parent=1 // pred_fallthru
      _
    %147 = vsyncpa [#allocation3], 1
    %148 = vsyncpa [#allocation6], 1
    %149 = vsyncpa [#allocation4], 1

</llo_original>
